<compile_context>
chip_gen: v7x
topology: tpu7x:2x2x1
jax: 0.10.0
libtpu: 0.0.40
codegen_flags: <defaults>
</compile_context>

<pallas_src>
import functools

import jax
import jax.numpy as jnp
import numpy as np
from jax import lax
from jax.experimental import pallas as pl
from jax.experimental.pallas import tpu as pltpu


def _fold_conv_weights(w_oihw, *, K, P, W, Cin, Cout, WP):
    """Fold kw/Cin contraction + pool-window-major column layout into weights.

    Returns Wf of shape (K, W*Cin, P*WP*Cout) with
        Wf[kh, w*Cin + ci, j*WP*Cout + pw*Cout + co]
            = w_oihw[co, ci, kh, w - (pw*P + j)]  if 0 <= w - (pw*P + j) < K
            = 0                                   otherwise
    so that, with x2[h, w*Cin + ci] = x[ci, h, w],
        conv[oh, pw*P + j, co] =
            sum_kh (x2[oh + kh, :] @ Wf[kh])[j*WP*Cout + pw*Cout + co].
    Each Wf entry is either 0 or exactly one original weight (exact fold).
    """
    w_hwio = jnp.transpose(w_oihw, (2, 3, 1, 0))                  # (K, K, Cin, Cout)
    kw_i = np.arange(K).reshape(K, 1, 1, 1)
    w_i = np.arange(W).reshape(1, W, 1, 1)
    j_i = np.arange(P).reshape(1, 1, P, 1)
    pw_i = np.arange(WP).reshape(1, 1, 1, WP)
    sel = (w_i == pw_i * P + j_i + kw_i).astype(np.float32)       # (K, W, P, WP)
    sel = jnp.asarray(sel, dtype=w_hwio.dtype)
    # (kw,w,j,pw),(kh,kw,ci,co) -> (kh, w, ci, j, pw, co)
    w_f = jnp.einsum("awjp,haio->hwijpo", sel, w_hwio)
    return w_f.reshape(K, W * Cin, P * WP * Cout)


def conv_block_forward(x_nchw, w_oihw, bias, *, kernel_size, max_pool_size):
    """Equivalent of ConvBlock.forward: valid Conv2d + MaxPool2d(stride=pool)."""
    N, Cin, H, W = x_nchw.shape
    Cout = w_oihw.shape[0]
    K = kernel_size
    P = max_pool_size
    HO, WO = H - K + 1, W - K + 1          # conv output (valid padding)
    HP, WP = HO // P, WO // P              # pooled output (floor, PyTorch default)
    CONV_N = P * WP * Cout                 # conv columns the pool actually consumes
    OUT_N = WP * Cout

    # ---- wrapper-side layout glue & weight folding (pure XLA, weight-only) ----
    x2 = jnp.transpose(x_nchw, (0, 2, 3, 1)).reshape(N, H, W * Cin)   # (N, H, W*Cin)
    w_f = _fold_conv_weights(w_oihw, K=K, P=P, W=W, Cin=Cin, Cout=Cout,
                             WP=WP).astype(x2.dtype)
    b_f = jnp.tile(bias, WP).reshape(1, OUT_N).astype(jnp.float32)    # col = pw*Cout + co

    def kernel(x_ref, w_ref, b_ref, o_ref, conv_scr):
        # x_ref:    (1, H, W*Cin)
        # w_ref:    (K, W*Cin, CONV_N)   -- VMEM-resident (constant index_map)
        # b_ref:    (1, OUT_N)
        # o_ref:    (1, HP, OUT_N)
        # conv_scr: (HO, CONV_N) f32 scratch

        # ---- Conv2d (valid): K slab matmuls on the MXU, f32 accumulation.
        acc = jnp.dot(x_ref[0, 0:HO, :], w_ref[0],
                      preferred_element_type=jnp.float32)
        for kh in range(1, K):
            acc = acc + jnp.dot(x_ref[0, kh:kh + HO, :], w_ref[kh],
                                preferred_element_type=jnp.float32)
        conv_scr[...] = acc                                   # (HO, CONV_N)

        # ---- MaxPool, H direction: P strided sublane loads over the slab.
        hmax = conv_scr[pl.ds(0, HP, stride=P), :]
        for i in range(1, P):
            hmax = jnp.maximum(hmax, conv_scr[pl.ds(i, HP, stride=P), :])

        # ---- MaxPool, W direction: columns are j-major, so the P pool
        # positions are contiguous lane slabs of width OUT_N.
        pooled = hmax[:, 0:OUT_N]
        for j in range(1, P):
            pooled = jnp.maximum(pooled, hmax[:, j * OUT_N:(j + 1) * OUT_N])

        # ---- Bias once (exact: max(x + b) == max(x) + b), single slab store.
        o_ref[0] = (pooled + b_ref[...]).astype(o_ref.dtype)

    itemsize = np.dtype(x2.dtype).itemsize
    cost = pl.CostEstimate(
        flops=2 * N * K * HO * (W * Cin) * CONV_N,
        transcendentals=0,
        bytes_accessed=(N * H * W * Cin + K * W * Cin * CONV_N
                        + N * HP * OUT_N) * itemsize + OUT_N * 4,
    )

    out = pl.pallas_call(
        kernel,
        out_shape=jax.ShapeDtypeStruct((N, HP, OUT_N), x_nchw.dtype),
        grid_spec=pltpu.PrefetchScalarGridSpec(
            num_scalar_prefetch=0,
            grid=(N,),                                        # 1 image per TC on v7x
            in_specs=[
                pl.BlockSpec((1, H, W * Cin), lambda b: (b, 0, 0)),
                pl.BlockSpec((K, W * Cin, CONV_N), lambda b: (0, 0, 0)),
                pl.BlockSpec((1, OUT_N), lambda b: (0, 0)),
            ],
            out_specs=pl.BlockSpec((1, HP, OUT_N), lambda b: (b, 0, 0)),
            scratch_shapes=[pltpu.VMEM((HO, CONV_N), jnp.float32)],
        ),
        compiler_params=pltpu.CompilerParams(
            dimension_semantics=("parallel",)),
        cost_estimate=cost,
    )(x2, w_f, b_f)

    # Layout back to PyTorch NCHW (wrapper-side reshape/transpose only).
    return jnp.transpose(out.reshape(N, HP, WP, Cout), (0, 3, 1, 2))


def reference_conv_block(x_nchw, w_oihw, bias, *, kernel_size, max_pool_size):
    """Pure-JAX reference (lax conv + reduce_window) for correctness check."""
    conv = lax.conv_general_dilated(
        x_nchw, w_oihw, window_strides=(1, 1), padding="VALID",
        dimension_numbers=("NCHW", "OIHW", "NCHW"),
    ) + bias.reshape(1, -1, 1, 1)
    p = max_pool_size
    return lax.reduce_window(
        conv, -jnp.inf, lax.max,
        window_dimensions=(1, 1, p, p), window_strides=(1, 1, p, p),
        padding="VALID",
    )


if __name__ == "__main__":
    # Module hyper-params (ConvBlock(kernel_size, max_pool_size, in_channel, out_channel))
    kernel_size = 3
    max_pool_size = 2
    in_channel = 4
    out_channel = 8

    # Small input consistent with NCHW conv usage.
    N, H, W = 2, 16, 16

    key = jax.random.PRNGKey(0)
    kx, kw, kb = jax.random.split(key, 3)

    x = jax.random.normal(kx, (N, in_channel, H, W), dtype=jnp.float32)

    # Deterministic parameter init mimicking PyTorch Conv2d default (uniform +/- 1/sqrt(fan_in)).
    fan_in = in_channel * kernel_size * kernel_size
    bound = 1.0 / float(np.sqrt(fan_in))
    w = jax.random.uniform(kw, (out_channel, in_channel, kernel_size, kernel_size),
                           minval=-bound, maxval=bound, dtype=jnp.float32)
    b = jax.random.uniform(kb, (out_channel,), minval=-bound, maxval=bound,
                           dtype=jnp.float32)

    fwd = jax.jit(functools.partial(conv_block_forward,
                                    kernel_size=kernel_size,
                                    max_pool_size=max_pool_size))
    out = fwd(x, w, b)
    out = jax.block_until_ready(out)

    ref = reference_conv_block(x, w, b, kernel_size=kernel_size,
                               max_pool_size=max_pool_size)
    np.testing.assert_allclose(np.asarray(out), np.asarray(ref), rtol=1e-5, atol=1e-5)
    assert out.shape == (N, out_channel, (H - kernel_size + 1) // max_pool_size,
                         (W - kernel_size + 1) // max_pool_size)

    print("KERNEL_OK")
</pallas_src>

<mosaic_0001>
module attributes {stable_mosaic.version = 11 : i64} {
  func.func @kernel(%arg0: i32, %arg1: memref<1x16x64xf32, #tpu.memory_space<vmem>>, %arg2: memref<3x64x112xf32, #tpu.memory_space<vmem>>, %arg3: memref<1x56xf32, #tpu.memory_space<vmem>>, %arg4: memref<1x7x56xf32, #tpu.memory_space<vmem>>, %arg5: memref<14x112xf32, #tpu.memory_space<vmem>>) attributes {dimension_semantics = [#tpu.dimension_semantics<parallel>], iteration_bounds = array<i64: 2>, scalar_prefetch = 0 : i64, scratch_operands = 1 : i64, tpu.core_type = #tpu.core_type<tc>, window_params = [{transform_indices = @transform_0, window_bounds = array<i64: 1, 16, 64>}, {pipeline_mode = #tpu.pipeline_mode<synchronous>, transform_indices = @transform_1, window_bounds = array<i64: 3, 64, 112>}, {pipeline_mode = #tpu.pipeline_mode<synchronous>, transform_indices = @transform_2, window_bounds = array<i64: 1, 56>}, {transform_indices = @transform_3, window_bounds = array<i64: 1, 7, 56>}]} {
    %c0 = arith.constant 0 : index
    %c0_0 = arith.constant 0 : index
    %c0_1 = arith.constant 0 : index
    %0 = vector.load %arg1[%c0, %c0_0, %c0_1] : memref<1x16x64xf32, #tpu.memory_space<vmem>>, vector<1x14x64xf32>
    %1 = vector.shape_cast %0 : vector<1x14x64xf32> to vector<14x64xf32>
    %c0_2 = arith.constant 0 : index
    %c0_3 = arith.constant 0 : index
    %c0_4 = arith.constant 0 : index
    %2 = vector.load %arg2[%c0_2, %c0_3, %c0_4] : memref<3x64x112xf32, #tpu.memory_space<vmem>>, vector<1x64x112xf32>
    %3 = vector.shape_cast %2 : vector<1x64x112xf32> to vector<64x112xf32>
    %cst = arith.constant dense<0.000000e+00> : vector<14x112xf32>
    %4 = tpu.matmul %1, %3, %cst {dimension_numbers = #tpu.dot_dimension_numbers<[1], [0], [0], [1], [0, 0, 1, 1], [], []>} : vector<14x64xf32>, vector<64x112xf32>, vector<14x112xf32> -> vector<14x112xf32>
    %c0_5 = arith.constant 0 : index
    %c1 = arith.constant 1 : index
    %c0_6 = arith.constant 0 : index
    %5 = vector.load %arg1[%c0_5, %c1, %c0_6] : memref<1x16x64xf32, #tpu.memory_space<vmem>>, vector<1x14x64xf32>
    %6 = vector.shape_cast %5 : vector<1x14x64xf32> to vector<14x64xf32>
    %c1_7 = arith.constant 1 : index
    %c0_8 = arith.constant 0 : index
    %c0_9 = arith.constant 0 : index
    %7 = vector.load %arg2[%c1_7, %c0_8, %c0_9] : memref<3x64x112xf32, #tpu.memory_space<vmem>>, vector<1x64x112xf32>
    %8 = vector.shape_cast %7 : vector<1x64x112xf32> to vector<64x112xf32>
    %cst_10 = arith.constant dense<0.000000e+00> : vector<14x112xf32>
    %9 = tpu.matmul %6, %8, %cst_10 {dimension_numbers = #tpu.dot_dimension_numbers<[1], [0], [0], [1], [0, 0, 1, 1], [], []>} : vector<14x64xf32>, vector<64x112xf32>, vector<14x112xf32> -> vector<14x112xf32>
    %10 = arith.addf %4, %9 : vector<14x112xf32>
    %c0_11 = arith.constant 0 : index
    %c2 = arith.constant 2 : index
    %c0_12 = arith.constant 0 : index
    %11 = vector.load %arg1[%c0_11, %c2, %c0_12] : memref<1x16x64xf32, #tpu.memory_space<vmem>>, vector<1x14x64xf32>
    %12 = vector.shape_cast %11 : vector<1x14x64xf32> to vector<14x64xf32>
    %c2_13 = arith.constant 2 : index
    %c0_14 = arith.constant 0 : index
    %c0_15 = arith.constant 0 : index
    %13 = vector.load %arg2[%c2_13, %c0_14, %c0_15] : memref<3x64x112xf32, #tpu.memory_space<vmem>>, vector<1x64x112xf32>
    %14 = vector.shape_cast %13 : vector<1x64x112xf32> to vector<64x112xf32>
    %cst_16 = arith.constant dense<0.000000e+00> : vector<14x112xf32>
    %15 = tpu.matmul %12, %14, %cst_16 {dimension_numbers = #tpu.dot_dimension_numbers<[1], [0], [0], [1], [0, 0, 1, 1], [], []>} : vector<14x64xf32>, vector<64x112xf32>, vector<14x112xf32> -> vector<14x112xf32>
    %16 = arith.addf %10, %15 : vector<14x112xf32>
    %c0_17 = arith.constant 0 : index
    %c0_18 = arith.constant 0 : index
    %17 = vector.load %arg5[%c0_17, %c0_18] : memref<14x112xf32, #tpu.memory_space<vmem>>, vector<14x112xf32>
    tpu.vector_store %arg5[%c0_17, %c0_18], %16 {strides = array<i32>} : memref<14x112xf32, #tpu.memory_space<vmem>>, vector<14x112xf32>,
    %c0_19 = arith.constant 0 : index
    %c0_20 = arith.constant 0 : index
    %18 = tpu.strided_load %arg5[%c0_19, %c0_20] {strides = array<i32: 2, 1>} : memref<14x112xf32, #tpu.memory_space<vmem>>, vector<7x112xf32>
    %c1_21 = arith.constant 1 : index
    %c0_22 = arith.constant 0 : index
    %19 = tpu.strided_load %arg5[%c1_21, %c0_22] {strides = array<i32: 2, 1>} : memref<14x112xf32, #tpu.memory_space<vmem>>, vector<7x112xf32>
    %20 = arith.maximumf %18, %19 : vector<7x112xf32>
    %21 = vector.extract_strided_slice %20 {offsets = [0, 0], sizes = [7, 56], strides = [1, 1]} : vector<7x112xf32> to vector<7x56xf32>
    %22 = vector.extract_strided_slice %20 {offsets = [0, 56], sizes = [7, 56], strides = [1, 1]} : vector<7x112xf32> to vector<7x56xf32>
    %23 = arith.maximumf %21, %22 : vector<7x56xf32>
    %c0_23 = arith.constant 0 : index
    %c0_24 = arith.constant 0 : index
    %24 = vector.load %arg3[%c0_23, %c0_24] : memref<1x56xf32, #tpu.memory_space<vmem>>, vector<1x56xf32>
    %25 = vector.broadcast %24 : vector<1x56xf32> to vector<7x56xf32>
    %26 = arith.addf %23, %25 : vector<7x56xf32>
    %c0_25 = arith.constant 0 : index
    %c0_26 = arith.constant 0 : index
    %c0_27 = arith.constant 0 : index
    %27 = vector.load %arg4[%c0_25, %c0_26, %c0_27] : memref<1x7x56xf32, #tpu.memory_space<vmem>>, vector<1x7x56xf32>
    %28 = vector.shape_cast %27 : vector<1x7x56xf32> to vector<7x56xf32>
    %29 = vector.shape_cast %26 : vector<7x56xf32> to vector<1x7x56xf32>
    tpu.vector_store %arg4[%c0_25, %c0_26, %c0_27], %29 {strides = array<i32>} : memref<1x7x56xf32, #tpu.memory_space<vmem>>, vector<1x7x56xf32>,
    return
  }
  func.func @transform_0(%arg0: i32) -> (i32, i32, i32) {
    %c0_i32 = arith.constant 0 : i32
    %c0_i32_0 = arith.constant 0 : i32
    %c0_i32_1 = arith.constant 0 : i32
    return %arg0, %c0_i32, %c0_i32_0 : i32, i32, i32
  }
  func.func @transform_1(%arg0: i32) -> (i32, i32, i32) {
    %c0_i32 = arith.constant 0 : i32
    %c0_i32_0 = arith.constant 0 : i32
    %c0_i32_1 = arith.constant 0 : i32
    %c0_i32_2 = arith.constant 0 : i32
    return %c0_i32, %c0_i32_0, %c0_i32_1 : i32, i32, i32
  }
  func.func @transform_2(%arg0: i32) -> (i32, i32) {
    %c0_i32 = arith.constant 0 : i32
    %c0_i32_0 = arith.constant 0 : i32
    %c0_i32_1 = arith.constant 0 : i32
    return %c0_i32, %c0_i32_0 : i32, i32
  }
  func.func @transform_3(%arg0: i32) -> (i32, i32, i32) {
    %c0_i32 = arith.constant 0 : i32
    %c0_i32_0 = arith.constant 0 : i32
    %c0_i32_1 = arith.constant 0 : i32
    return %arg0, %c0_i32, %c0_i32_0 : i32, i32, i32
  }
}

</mosaic_0001>

<llo_original>
// kernel: tile.8
$region0: #{tile.8}
  #allocation0 [shape = 's32[1]{0}', space=sflag, size = 0x4, scoped, tag = 'scoped memory for tile.8']
  %s0 = inlined_call_operand.vmem [shape: f32[8], index: 0, kind: input, shape index: {}]
  %s1 = inlined_call_operand.vmem [shape: f32[7,8], index: 1, kind: output, shape index: {}]
  // Predicated region
  $region2: #{tile.8} parent=0 // pred_check
    _
  $region3: #{tile.8} parent=0 // pred_check_branch
    %3 = sbr.rel (0) target = $region5
  $region4: #{tile.8} parent=0 // pred_region
    _
  $region5: #{tile.8} parent=0 // pred_fallthru
    _
  %v4 = vld [vmem:[%s0] ss:$0 sm:$0xff]
  %5 = vst [vmem:[%s1] sm:$0xff] %v4

// kernel: tile.9
$region0: #{tile.9}
  %s0 = inlined_call_operand.vmem [shape: f32[7,8], index: 0, kind: input, shape index: {}]
  %s1 = inlined_call_operand.vmem [shape: f32[1,56], index: 1, kind: output, shape index: {}]
  $region1: #{tile.9} parent=0
    #allocation0 [shape = 'u8[4096]{0}', space=vmem, size = 0x1000, scoped, tag = 'scoped mem for output reshape']
    %v2 = vld [vmem:[%s0] sm:$0x1]
    %vm3 = vcmask 64512
    %4 = vst.msk [vmem:[#allocation0] sm:$0x1] %vm3, %v2
    %s5 = scalar_lea.vmem %s0, 6
    %v6 = vld [vmem:[%s5] sm:$0x1]
    %7 = vrot.lane.b32.xlu0 %v6, 48
    %v8 = vpop.permute.xlu0 %7
    %vm9 = vcmask 458112
    %10 = vst.msk [vmem:[#allocation0] sm:$0x1] %vm9, %v8
    %s11 = scalar_lea.vmem %s0, 5
    %v12 = vld [vmem:[%s11] sm:$0x1]
    %13 = vrot.lane.b32.xlu0 %v12, 40
    %v14 = vpop.permute.xlu0 %13
    %vm15 = vcmask 392512
    %16 = vst.msk [vmem:[#allocation0] sm:$0x1] %vm15, %v14
    %s17 = scalar_lea.vmem %s0, 4
    %v18 = vld [vmem:[%s17] sm:$0x1]
    %19 = vrot.lane.b32.xlu0 %v18, 32
    %v20 = vpop.permute.xlu0 %19
    %vm21 = vcmask 326912
    %22 = vst.msk [vmem:[#allocation0] sm:$0x1] %vm21, %v20
    %s23 = scalar_lea.vmem %s0, 3
    %v24 = vld [vmem:[%s23] sm:$0x1]
    %25 = vrot.lane.b32.xlu0 %v24, 24
    %v26 = vpop.permute.xlu0 %25
    %vm27 = vcmask 261312
    %28 = vst.msk [vmem:[#allocation0] sm:$0x1] %vm27, %v26
    %s29 = scalar_lea.vmem %s0, 2
    %v30 = vld [vmem:[%s29] sm:$0x1]
    %31 = vrot.lane.b32.xlu0 %v30, 16
    %v32 = vpop.permute.xlu0 %31
    %vm33 = vcmask 195712
    %34 = vst.msk [vmem:[#allocation0] sm:$0x1] %vm33, %v32
    %s35 = scalar_lea.vmem %s0, 1
    %v36 = vld [vmem:[%s35] sm:$0x1]
    %37 = vrot.lane.b32.xlu0 %v36, 8
    %v38 = vpop.permute.xlu0 %37
    %vm39 = vcmask 130112
    %40 = vst.msk [vmem:[#allocation0] sm:$0x1] %vm39, %v38
    %s42 = sshllo.u32 0, 1
    %v44 = vld [vmem:[#allocation0] sm:%s42]
    %s45 = sshllo.u32 0, 1
    %46 = vst [vmem:[%s1] sm:%s45] %v44

// kernel: conv_block_forward.1
$region0: #{conv_block_forward.1}
  #allocation0 [shape = 'u32[]', space=smem, size = 0x4, offset = 0x4, fixed_abs, tag = 'smem constant byte address 0x4 - core index']
  #allocation1 [shape = 'u32[144,128]{1,0:T(1,128)}', space=vmem, size = 0x12000, scoped, tag = 'internal scratch']
  #allocation2 [shape = 'f32[14,112]{1,0:T(8,128)}', space=vmem, size = 0x2000, scoped, tag = 'scratch operand']
  %s0 = inlined_call_operand.vmem [shape: f32[2,16,64], index: 0, kind: input, shape index: {}]
  %s1 = inlined_call_operand.vmem [shape: f32[3,64,112], index: 1, kind: input, shape index: {}]
  %s2 = inlined_call_operand.vmem [shape: f32[1,56], index: 2, kind: input, shape index: {}]
  %s3 = inlined_call_operand.vmem [shape: f32[2,7,56], index: 3, kind: output, shape index: {}]
  %s4 = sld [smem:[#allocation0]]
  $region45: #{conv_block_forward.1} parent=0
    _
  %s6 = ssub.s32 1, %s4
  %s7 = scalar_select 0, %s6, %s4
  loop: start=0, step=1, limit=4
  $region2: #{conv_block_forward.1} parent=0 // loop_pre_header
    _
  $region3: #{conv_block_forward.1} parent=0 // loop_header
    %s9 = sphi 0, %s13
    %p10 = scmp.ge.s32.totalorder %s9, 4
    %s19 = sphi 0, %s21
    %s22 = sphi 0, %s19
    %s23 = sphi 0, %s22
    %s39 = sphi 0, %s23
    %s43 = sphi 0, %s43
    %s45 = sphi 0, %s43
    %s46 = sphi 0, %s45
    %s60 = sphi 0, %s46
    %s64 = sphi 0, %s64
    %s66 = sphi 0, %s64
    %s67 = sphi 0, %s66
    %s81 = sphi 0, %s67
    %s87 = sphi 0, %s89
    %s90 = sphi 0, %s87
    %s91 = sphi 0, %s90
    %s107 = sphi 0, %s91
  $region4: #{conv_block_forward.1} parent=0 // loop_header_branch
    %12 = sbr.rel (%p10) target = $region8
  $region5: #{conv_block_forward.1} parent=0 // loop_body
    %s14 = ssub.s32 %s9, 1
    %s15 = ssub.s32 %s9, 2
    %s16 = sadd.s32 %s9, 1
    %s17 = ssub.s32 %s9, %s16
    %p18 = scmp.eq.s32.totalorder %s17, 0
    %s20 = sadd.s32 %s19, 1
    %s21 = scalar_select %p18, %s19, %s20
    %p24 = pneg %p18
    %p25 = scmp.eq.s32.totalorder %s9, 1
    %p26 = por %p24, %p25
    %p27 = scmp.ne.s32.totalorder %s19, %s22
    %p28 = scmp.eq.s32.totalorder %s9, 0
    %p29 = por %p27, %p28
    %p30 = scmp.ne.s32.totalorder %s19, %s22
    %p31 = scmp.eq.s32.totalorder %s14, 1
    %p32 = por %p30, %p31
    %p33 = scmp.ne.s32.totalorder %s22, %s23
    %p34 = scmp.eq.s32.totalorder %s14, 0
    %p35 = por %p33, %p34
    %p36 = scmp.ne.s32.totalorder %s22, %s23
    %p37 = scmp.eq.s32.totalorder %s15, 1
    %p38 = por %p36, %p37
    %p40 = scmp.ne.s32.totalorder %s23, %s39
    %p41 = scmp.eq.s32.totalorder %s15, 0
    %p42 = por %p40, %p41
    %s44 = sadd.s32 %s43, 1
    %p47 = scmp.eq.s32.totalorder %s9, 1
    %p48 = scmp.ne.s32.totalorder %s43, %s45
    %p49 = scmp.eq.s32.totalorder %s9, 0
    %p50 = por %p48, %p49
    %p51 = scmp.ne.s32.totalorder %s43, %s45
    %p52 = scmp.eq.s32.totalorder %s14, 1
    %p53 = por %p51, %p52
    %p54 = scmp.ne.s32.totalorder %s45, %s46
    %p55 = scmp.eq.s32.totalorder %s14, 0
    %p56 = por %p54, %p55
    %p57 = scmp.ne.s32.totalorder %s45, %s46
    %p58 = scmp.eq.s32.totalorder %s15, 1
    %p59 = por %p57, %p58
    %p61 = scmp.ne.s32.totalorder %s46, %s60
    %p62 = scmp.eq.s32.totalorder %s15, 0
    %p63 = por %p61, %p62
    %s65 = sadd.s32 %s64, 1
    %p68 = scmp.eq.s32.totalorder %s9, 1
    %p69 = scmp.ne.s32.totalorder %s64, %s66
    %p70 = scmp.eq.s32.totalorder %s9, 0
    %p71 = por %p69, %p70
    %p72 = scmp.ne.s32.totalorder %s64, %s66
    %p73 = scmp.eq.s32.totalorder %s14, 1
    %p74 = por %p72, %p73
    %p75 = scmp.ne.s32.totalorder %s66, %s67
    %p76 = scmp.eq.s32.totalorder %s14, 0
    %p77 = por %p75, %p76
    %p78 = scmp.ne.s32.totalorder %s66, %s67
    %p79 = scmp.eq.s32.totalorder %s15, 1
    %p80 = por %p78, %p79
    %p82 = scmp.ne.s32.totalorder %s67, %s81
    %p83 = scmp.eq.s32.totalorder %s15, 0
    %p84 = por %p82, %p83
    %s85 = ssub.s32 %s9, %s16
    %p86 = scmp.eq.s32.totalorder %s85, 0
    %s88 = sadd.s32 %s87, 1
    %s89 = scalar_select %p86, %s87, %s88
    %p92 = pneg %p86
    %p93 = scmp.eq.s32.totalorder %s9, 1
    %p94 = por %p92, %p93
    %p95 = scmp.ne.s32.totalorder %s87, %s90
    %p96 = scmp.eq.s32.totalorder %s9, 0
    %p97 = por %p95, %p96
    %p98 = scmp.ne.s32.totalorder %s87, %s90
    %p99 = scmp.eq.s32.totalorder %s14, 1
    %p100 = por %p98, %p99
    %p101 = scmp.ne.s32.totalorder %s90, %s91
    %p102 = scmp.eq.s32.totalorder %s14, 0
    %p103 = por %p101, %p102
    %p104 = scmp.ne.s32.totalorder %s90, %s91
    %p105 = scmp.eq.s32.totalorder %s15, 1
    %p106 = por %p104, %p105
    %p108 = scmp.ne.s32.totalorder %s91, %s107
    %p109 = scmp.eq.s32.totalorder %s15, 0
    %p110 = por %p108, %p109
    %p111 = scmp.le.s32.totalorder 1, %s9
    %p112 = scmp.lt.s32.totalorder %s9, 3
    %p113 = pnand %p111, %p112
    %p114 = pneg %p113
    // Predicated region
    $region9: #{conv_block_forward.1} parent=5 // pred_check
      _
    $region10: #{conv_block_forward.1} parent=5 // pred_check_branch
      %116 = sbr.rel (%p113) target = $region12
    $region11: #{conv_block_forward.1} parent=5 // pred_region
      %s117 = ssub.s32 %s9, 1
      // Predicated region
      $region13: #{conv_block_forward.1} parent=11 // pred_check
        %p118 = pneg %p56
      $region14: #{conv_block_forward.1} parent=11 // pred_check_branch
        %120 = sbr.rel (%p118) target = $region16
      $region15: #{conv_block_forward.1} parent=11 // pred_region
        _
      $region16: #{conv_block_forward.1} parent=11 // pred_fallthru
        _
      // Predicated region
      $region17: #{conv_block_forward.1} parent=11 // pred_check
        %p121 = pneg %p77
      $region18: #{conv_block_forward.1} parent=11 // pred_check_branch
        %123 = sbr.rel (%p121) target = $region20
      $region19: #{conv_block_forward.1} parent=11 // pred_region
        _
      $region20: #{conv_block_forward.1} parent=11 // pred_fallthru
        _
    $region12: #{conv_block_forward.1} parent=5 // pred_fallthru
      _
    %p124 = scmp.lt.s32.totalorder %s9, 2
    // Predicated region
    $region21: #{conv_block_forward.1} parent=5 // pred_check
      %p125 = pneg %p124
    $region22: #{conv_block_forward.1} parent=5 // pred_check_branch
      %127 = sbr.rel (%p125) target = $region24
    $region23: #{conv_block_forward.1} parent=5 // pred_region
      // Predicated region
      $region25: #{conv_block_forward.1} parent=23 // pred_check
        %p128 = pneg %p29
      $region26: #{conv_block_forward.1} parent=23 // pred_check_branch
        %130 = sbr.rel (%p128) target = $region28
      $region27: #{conv_block_forward.1} parent=23 // pred_region
        %p131 = scmp.lt.s32.totalorder %s9, 1
        %s132 = scalar_select %p131, %s9, 1
        %s133 = smul.addr %s132, 2
        %s134 = smul.addr %s133, 8
        %s135 = scalar_lea.vmem %s0, %s134
      $region28: #{conv_block_forward.1} parent=23 // pred_fallthru
        _
    $region24: #{conv_block_forward.1} parent=5 // pred_fallthru
      _
    %p136 = scmp.le.s32.totalorder 1, %s9
    %p137 = scmp.lt.s32.totalorder %s9, 3
    %p138 = pnand %p136, %p137
    %p139 = pneg %p138
    // Predicated region
    $region29: #{conv_block_forward.1} parent=5 // pred_check
      _
    $region30: #{conv_block_forward.1} parent=5 // pred_check_branch
      %141 = sbr.rel (%p138) target = $region32
    $region31: #{conv_block_forward.1} parent=5 // pred_region
      %s142 = ssub.s32 %s9, 1
      %p143 = scmp.lt.s32.totalorder %s14, 1
      %s144 = scalar_select %p143, %s14, 1
      %s145 = smul.addr %s144, 2
      %s146 = smul.addr %s145, 8
      %s147 = scalar_lea.vmem %s0, %s146
      %p148 = pneg %p35
      %p149 = pneg %p32
      %p150 = pneg %p56
      %p151 = pneg %p53
      %p152 = pneg %p77
      %p153 = pneg %p74
      %p154 = pneg %p103
      %p155 = pneg %p100
      %p156 = scmp.lt.s32.totalorder %s14, 1
      %s157 = scalar_select %p156, %s14, 1
      %s158 = smul.addr %s157, 8
      %s159 = scalar_lea.vmem %s3, %s158
      %p160 = scmp.lt.s32.totalorder %s14, 1
      %s161 = scalar_select %p160, %s14, 1
      %s162 = smul.addr %s161, 2
      %s163 = smul.addr %s162, 8
      %s164 = scalar_lea.vmem %s0, %s163
      %p165 = scmp.lt.s32.totalorder %s14, 1
      %s166 = scalar_select %p165, %s14, 1
      %s167 = smul.addr %s166, 8
      %s168 = scalar_lea.vmem %s3, %s167
      %v169 = vld [vmem:[%s164] sm:$0xff]
      %v170 = vld [vmem:[%s164 + $0x8] sm:$0x3f]
      %v171 = vld [vmem:[%s1] sm:$0xff]
      %v172 = vld [vmem:[%s1 + $0x8] sm:$0xff]
      %v173 = vld [vmem:[%s1 + $0x10] sm:$0xff]
      %v174 = vld [vmem:[%s1 + $0x18] sm:$0xff]
      %v175 = vld [vmem:[%s1 + $0x20] sm:$0xff]
      %v176 = vld [vmem:[%s1 + $0x28] sm:$0xff]
      %v177 = vld [vmem:[%s1 + $0x30] sm:$0xff]
      %v178 = vld [vmem:[%s1 + $0x38] sm:$0xff]
      %v179 = vld [vmem:[%s164 + $0x1] sm:$0xff]
      %v180 = vld [vmem:[%s164 + $0x9] sm:$0x3f]
      %s181 = scalar_lea.vmem %s1, 64
      %v182 = vld [vmem:[%s181] sm:$0xff]
      %v183 = vld [vmem:[%s181 + $0x8] sm:$0xff]
      %v184 = vld [vmem:[%s181 + $0x10] sm:$0xff]
      %v185 = vld [vmem:[%s181 + $0x18] sm:$0xff]
      %v186 = vld [vmem:[%s181 + $0x20] sm:$0xff]
      %v187 = vld [vmem:[%s181 + $0x28] sm:$0xff]
      %v188 = vld [vmem:[%s181 + $0x30] sm:$0xff]
      %v189 = vld [vmem:[%s181 + $0x38] sm:$0xff]
      %vm190 = vcmask 523264
      %v192 = vsel %vm190, %v179, 0
      %v195 = vsel %vm190, %v180, 0
      %197 = vmatprep.subr.mxu0 0.0
      %198 = vmatpush1.msra.mxu0 %v182
      %199 = vmatprep.subr.mxu0 0.0
      %200 = vmatpush1.msra.mxu0 %v183
      %201 = vmatprep.subr.mxu0 0.0
      %202 = vmatpush1.msra.mxu0 %v184
      %203 = vmatprep.subr.mxu0 0.0
      %204 = vmatpush1.msra.mxu0 %v185
      %205 = vmatprep.subr.mxu0 0.0
      %206 = vmatpush1.msra.mxu0 %v186
      %207 = vmatprep.subr.mxu0 0.0
      %208 = vmatpush1.msra.mxu0 %v187
      %209 = vmatprep.subr.mxu0 0.0
      %210 = vmatpush1.msra.mxu0 %v188
      %211 = vmatprep.subr.mxu0 0.0
      %212 = vmatpush1.msra.mxu0 %v189
      %213 = vmatprep.subr.mxu0 0.0
      %214 = vmatpush1.msra.mxu0 0.0
      %215 = vmatprep.subr.mxu0 0.0
      %216 = vmatpush1.msra.mxu0 0.0
      %217 = vmatprep.subr.mxu0 0.0
      %218 = vmatpush1.msra.mxu0 0.0
      %219 = vmatprep.subr.mxu0 0.0
      %220 = vmatpush1.msra.mxu0 0.0
      %221 = vmatprep.subr.mxu0 0.0
      %222 = vmatpush1.msra.mxu0 0.0
      %223 = vmatprep.subr.mxu0 0.0
      %224 = vmatpush1.msra.mxu0 0.0
      %225 = vmatprep.subr.mxu0 0.0
      %226 = vmatpush1.msra.mxu0 0.0
      %227 = vmatprep.subr.mxu0 0.0
      %228 = vmatpush1.msra.mxu0 0.0
      %229 = vmatprep.subr.mxu0 0.0
      %230 = vmatpush1.msra.mxu0 0.0
      %231 = vmatprep.subr.mxu0 0.0
      %232 = vmatpush1.msra.mxu0 0.0
      %233 = vmatprep.subr.mxu0 0.0
      %234 = vmatpush1.msra.mxu0 0.0
      %235 = vmatprep.subr.mxu0 0.0
      %236 = vmatpush1.msra.mxu0 0.0
      %237 = vmatprep.subr.mxu0 0.0
      %238 = vmatpush1.msra.mxu0 0.0
      %239 = vmatprep.subr.mxu0 0.0
      %240 = vmatpush1.msra.mxu0 0.0
      %241 = vmatprep.subr.mxu0 0.0
      %242 = vmatpush1.msra.mxu0 0.0
      %243 = vmatprep.subr.mxu0 0.0
      %244 = vmatpush1.msra.mxu0 0.0
      %245 = vmatprep.subr.mxu0 0.0
      %246 = vmatpush1.msra.mxu0 0.0
      %247 = vmatprep.subr.mxu0 0.0
      %248 = vmatpush1.msra.mxu0 0.0
      %249 = vmatprep.subr.mxu0 0.0
      %250 = vmatpush1.msra.mxu0 0.0
      %251 = vmatprep.subr.mxu0 0.0
      %252 = vmatpush1.msra.mxu0 0.0
      %253 = vmatprep.subr.mxu0 0.0
      %254 = vmatpush1.msra.mxu0 0.0
      %255 = vmatprep.subr.mxu0 0.0
      %256 = vmatpush1.msra.mxu0 0.0
      %257 = vmatprep.subr.mxu0 0.0
      %258 = vmatpush1.msra.mxu0 0.0
      %259 = vmatprep.subr.mxu0 0.0
      %260 = vmatpush1.msra.mxu0 0.0
      %261 = vmatprep.mubr.f32.mxu0 0.0
      %262 = vmatmul.mubr.f32.gmra.mrb[0].mxu0 %v192
      %v263 = vpop.f32.mrb[0].mxu0
      %v264 = vadd.f32 0.0, %v263
      %v265 = vpop.f32.mrb[0].mxu0
      %266 = vmatprep.mubr.f32.mxu0 0.0
      %267 = vmatmul.mubr.f32.gmra.mrb[0].mxu0 %v195
      %v268 = vpop.f32.mrb[0].mxu0
      %v269 = vadd.f32 0.0, %v268
      %v270 = vpop.f32.mrb[0].mxu0
      %271 = vdwg.mxu0
      %v273 = vsel %vm190, %v169, 0
      %v276 = vsel %vm190, %v170, 0
      %278 = vmatprep.subr.mxu0 0.0
      %279 = vmatpush1.msra.mxu0 %v171
      %280 = vmatprep.subr.mxu0 0.0
      %281 = vmatpush1.msra.mxu0 %v172
      %282 = vmatprep.subr.mxu0 0.0
      %283 = vmatpush1.msra.mxu0 %v173
      %284 = vmatprep.subr.mxu0 0.0
      %285 = vmatpush1.msra.mxu0 %v174
      %286 = vmatprep.subr.mxu0 0.0
      %287 = vmatpush1.msra.mxu0 %v175
      %288 = vmatprep.subr.mxu0 0.0
      %289 = vmatpush1.msra.mxu0 %v176
      %290 = vmatprep.subr.mxu0 0.0
      %291 = vmatpush1.msra.mxu0 %v177
      %292 = vmatprep.subr.mxu0 0.0
      %293 = vmatpush1.msra.mxu0 %v178
      %294 = vmatprep.subr.mxu0 0.0
      %295 = vmatpush1.msra.mxu0 0.0
      %296 = vmatprep.subr.mxu0 0.0
      %297 = vmatpush1.msra.mxu0 0.0
      %298 = vmatprep.subr.mxu0 0.0
      %299 = vmatpush1.msra.mxu0 0.0
      %300 = vmatprep.subr.mxu0 0.0
      %301 = vmatpush1.msra.mxu0 0.0
      %302 = vmatprep.subr.mxu0 0.0
      %303 = vmatpush1.msra.mxu0 0.0
      %304 = vmatprep.subr.mxu0 0.0
      %305 = vmatpush1.msra.mxu0 0.0
      %306 = vmatprep.subr.mxu0 0.0
      %307 = vmatpush1.msra.mxu0 0.0
      %308 = vmatprep.subr.mxu0 0.0
      %309 = vmatpush1.msra.mxu0 0.0
      %310 = vmatprep.subr.mxu0 0.0
      %311 = vmatpush1.msra.mxu0 0.0
      %312 = vmatprep.subr.mxu0 0.0
      %313 = vmatpush1.msra.mxu0 0.0
      %314 = vmatprep.subr.mxu0 0.0
      %315 = vmatpush1.msra.mxu0 0.0
      %316 = vmatprep.subr.mxu0 0.0
      %317 = vmatpush1.msra.mxu0 0.0
      %318 = vmatprep.subr.mxu0 0.0
      %319 = vmatpush1.msra.mxu0 0.0
      %320 = vmatprep.subr.mxu0 0.0
      %321 = vmatpush1.msra.mxu0 0.0
      %322 = vmatprep.subr.mxu0 0.0
      %323 = vmatpush1.msra.mxu0 0.0
      %324 = vmatprep.subr.mxu0 0.0
      %325 = vmatpush1.msra.mxu0 0.0
      %326 = vmatprep.subr.mxu0 0.0
      %327 = vmatpush1.msra.mxu0 0.0
      %328 = vmatprep.subr.mxu0 0.0
      %329 = vmatpush1.msra.mxu0 0.0
      %330 = vmatprep.subr.mxu0 0.0
      %331 = vmatpush1.msra.mxu0 0.0
      %332 = vmatprep.subr.mxu0 0.0
      %333 = vmatpush1.msra.mxu0 0.0
      %334 = vmatprep.subr.mxu0 0.0
      %335 = vmatpush1.msra.mxu0 0.0
      %336 = vmatprep.subr.mxu0 0.0
      %337 = vmatpush1.msra.mxu0 0.0
      %338 = vmatprep.subr.mxu0 0.0
      %339 = vmatpush1.msra.mxu0 0.0
      %340 = vmatprep.subr.mxu0 0.0
      %341 = vmatpush1.msra.mxu0 0.0
      %342 = vmatprep.mubr.f32.mxu0 0.0
      %343 = vmatmul.mubr.f32.gmra.mrb[0].mxu0 %v273
      %v344 = vpop.f32.mrb[0].mxu0
      %v345 = vadd.f32 %v264, %v344
      %v346 = vpop.f32.mrb[0].mxu0
      %347 = vmatprep.mubr.f32.mxu0 0.0
      %348 = vmatmul.mubr.f32.gmra.mrb[0].mxu0 %v276
      %v349 = vpop.f32.mrb[0].mxu0
      %v350 = vadd.f32 %v269, %v349
      %v351 = vpop.f32.mrb[0].mxu0
      %352 = vdwg.mxu0
      %v353 = vld [vmem:[%s164 + $0x2] sm:$0xff]
      %v354 = vld [vmem:[%s164 + $0xa] sm:$0x3f]
      %s355 = scalar_lea.vmem %s1, 128
      %v356 = vld [vmem:[%s355] sm:$0xff]
      %v357 = vld [vmem:[%s355 + $0x8] sm:$0xff]
      %v358 = vld [vmem:[%s355 + $0x10] sm:$0xff]
      %v359 = vld [vmem:[%s355 + $0x18] sm:$0xff]
      %v360 = vld [vmem:[%s355 + $0x20] sm:$0xff]
      %v361 = vld [vmem:[%s355 + $0x28] sm:$0xff]
      %v362 = vld [vmem:[%s355 + $0x30] sm:$0xff]
      %v363 = vld [vmem:[%s355 + $0x38] sm:$0xff]
      %v365 = vsel %vm190, %v353, 0
      %v368 = vsel %vm190, %v354, 0
      %370 = vmatprep.subr.mxu0 0.0
      %371 = vmatpush1.msra.mxu0 %v356
      %372 = vmatprep.subr.mxu0 0.0
      %373 = vmatpush1.msra.mxu0 %v357
      %374 = vmatprep.subr.mxu0 0.0
      %375 = vmatpush1.msra.mxu0 %v358
      %376 = vmatprep.subr.mxu0 0.0
      %377 = vmatpush1.msra.mxu0 %v359
      %378 = vmatprep.subr.mxu0 0.0
      %379 = vmatpush1.msra.mxu0 %v360
      %380 = vmatprep.subr.mxu0 0.0
      %381 = vmatpush1.msra.mxu0 %v361
      %382 = vmatprep.subr.mxu0 0.0
      %383 = vmatpush1.msra.mxu0 %v362
      %384 = vmatprep.subr.mxu0 0.0
      %385 = vmatpush1.msra.mxu0 %v363
      %386 = vmatprep.subr.mxu0 0.0
      %387 = vmatpush1.msra.mxu0 0.0
      %388 = vmatprep.subr.mxu0 0.0
      %389 = vmatpush1.msra.mxu0 0.0
      %390 = vmatprep.subr.mxu0 0.0
      %391 = vmatpush1.msra.mxu0 0.0
      %392 = vmatprep.subr.mxu0 0.0
      %393 = vmatpush1.msra.mxu0 0.0
      %394 = vmatprep.subr.mxu0 0.0
      %395 = vmatpush1.msra.mxu0 0.0
      %396 = vmatprep.subr.mxu0 0.0
      %397 = vmatpush1.msra.mxu0 0.0
      %398 = vmatprep.subr.mxu0 0.0
      %399 = vmatpush1.msra.mxu0 0.0
      %400 = vmatprep.subr.mxu0 0.0
      %401 = vmatpush1.msra.mxu0 0.0
      %402 = vmatprep.subr.mxu0 0.0
      %403 = vmatpush1.msra.mxu0 0.0
      %404 = vmatprep.subr.mxu0 0.0
      %405 = vmatpush1.msra.mxu0 0.0
      %406 = vmatprep.subr.mxu0 0.0
      %407 = vmatpush1.msra.mxu0 0.0
      %408 = vmatprep.subr.mxu0 0.0
      %409 = vmatpush1.msra.mxu0 0.0
      %410 = vmatprep.subr.mxu0 0.0
      %411 = vmatpush1.msra.mxu0 0.0
      %412 = vmatprep.subr.mxu0 0.0
      %413 = vmatpush1.msra.mxu0 0.0
      %414 = vmatprep.subr.mxu0 0.0
      %415 = vmatpush1.msra.mxu0 0.0
      %416 = vmatprep.subr.mxu0 0.0
      %417 = vmatpush1.msra.mxu0 0.0
      %418 = vmatprep.subr.mxu0 0.0
      %419 = vmatpush1.msra.mxu0 0.0
      %420 = vmatprep.subr.mxu0 0.0
      %421 = vmatpush1.msra.mxu0 0.0
      %422 = vmatprep.subr.mxu0 0.0
      %423 = vmatpush1.msra.mxu0 0.0
      %424 = vmatprep.subr.mxu0 0.0
      %425 = vmatpush1.msra.mxu0 0.0
      %426 = vmatprep.subr.mxu0 0.0
      %427 = vmatpush1.msra.mxu0 0.0
      %428 = vmatprep.subr.mxu0 0.0
      %429 = vmatpush1.msra.mxu0 0.0
      %430 = vmatprep.subr.mxu0 0.0
      %431 = vmatpush1.msra.mxu0 0.0
      %432 = vmatprep.subr.mxu0 0.0
      %433 = vmatpush1.msra.mxu0 0.0
      %434 = vmatprep.mubr.f32.mxu0 0.0
      %435 = vmatmul.mubr.f32.gmra.mrb[0].mxu0 %v365
      %v436 = vpop.f32.mrb[0].mxu0
      %v437 = vadd.f32 0.0, %v436
      %v438 = vpop.f32.mrb[0].mxu0
      %439 = vmatprep.mubr.f32.mxu0 0.0
      %440 = vmatmul.mubr.f32.gmra.mrb[0].mxu0 %v368
      %v441 = vpop.f32.mrb[0].mxu0
      %v442 = vadd.f32 0.0, %v441
      %v443 = vpop.f32.mrb[0].mxu0
      %444 = vdwg.mxu0
      %v445 = vadd.f32 %v345, %v437
      %v446 = vadd.f32 %v350, %v442
      %vm447 = vcmask 916480
      %448 = vst.msk [vmem:[#allocation2] sm:$0xff] %vm447, %v445
      %vm449 = vcmask 914432
      %450 = vst.msk [vmem:[#allocation2 + $0x8] sm:$0x3f] %vm449, %v446
      %v451 = vld [vmem:[#allocation2] ss:$2 sm:$0x7f]
      %s452 = scalar_lea.vmem [#allocation2], 1
      %v453 = vld [vmem:[%s452] ss:$2 sm:$0x7f]
      %v454 = vmax.f32 %v451, %v453
      %456 = vrot.lane.b32.xlu0 %v454, 72
      %v457 = vpop.permute.xlu0 %456
      %v459 = vmax.f32 %v454, %v457
      %v460 = vld [vmem:[%s2] sm:$0x1]
      %v462 = vlaneseq
      %v463 = vshrl.u32 %v462, 7
      %v464 = vsub.s32 0, %v463
      %v465 = vrot.slane %v460, %v464
      %v467 = vadd.f32 %v459, %v465
      %vm468 = vcmask 456704
      %469 = vst.msk [vmem:[%s168] sm:$0x7f] %vm468, %v467
      %p470 = scmp.lt.s32.totalorder %s14, 1
      %s471 = scalar_select %p470, %s14, 1
      %s472 = smul.addr %s471, 8
      %s473 = scalar_lea.vmem %s3, %s472
      // Predicated region
      $region33: #{conv_block_forward.1} parent=31 // pred_check
        %p474 = pneg %p100
      $region34: #{conv_block_forward.1} parent=31 // pred_check_branch
        %476 = sbr.rel (%p474) target = $region36
      $region35: #{conv_block_forward.1} parent=31 // pred_region
        _
      $region36: #{conv_block_forward.1} parent=31 // pred_fallthru
        _
    $region32: #{conv_block_forward.1} parent=5 // pred_fallthru
      _
    %p477 = scmp.le.s32.totalorder 2, %s9
    // Predicated region
    $region37: #{conv_block_forward.1} parent=5 // pred_check
      %p478 = pneg %p477
    $region38: #{conv_block_forward.1} parent=5 // pred_check_branch
      %480 = sbr.rel (%p478) target = $region40
    $region39: #{conv_block_forward.1} parent=5 // pred_region
      %s481 = ssub.s32 %s9, 2
      // Predicated region
      $region41: #{conv_block_forward.1} parent=39 // pred_check
        %p482 = pneg %p106
      $region42: #{conv_block_forward.1} parent=39 // pred_check_branch
        %484 = sbr.rel (%p482) target = $region44
      $region43: #{conv_block_forward.1} parent=39 // pred_region
        %p485 = scmp.lt.s32.totalorder %s15, 1
        %s486 = scalar_select %p485, %s15, 1
        %s487 = smul.addr %s486, 8
        %s488 = scalar_lea.vmem %s3, %s487
      $region44: #{conv_block_forward.1} parent=39 // pred_fallthru
        _
    $region40: #{conv_block_forward.1} parent=5 // pred_fallthru
      _
  $region6: #{conv_block_forward.1} parent=0 // loop_footer
    %s13 = sadd.s32 1, %s9
  $region7: #{conv_block_forward.1} parent=0 // loop_footer_branch
    %8 = sbr.rel target = $region3
  $region8: #{conv_block_forward.1} parent=0 // loop_exit
    _

</llo_original>
